<compile_context>
chip_gen: v5e
topology: v5e:2x2
jax: 0.10.0
libtpu: 0.0.40
codegen_flags: <defaults>
</compile_context>

<pallas_src>
import functools

import jax
import jax.numpy as jnp
from jax import lax
from jax.experimental import pallas as pl
from jax.experimental.pallas import tpu as pltpu


def edgeconv_kernel(q_ref, keys_ref, w1_ref, w21_ref, o_ref, *, k, gather_dtype):
    # q_ref:    (1, C, TM)   queries (channel-major)
    # keys_ref: (1, C, N)    all key points for this batch
    # w1_ref:   (out_dim, C) neighbor-half weight
    # w21_ref:  (out_dim, C) (center-half - neighbor-half) weight
    # o_ref:    (1, out_dim, TM)
    pq = q_ref[0]                       # (C, TM), MXU-fed in native dtype
    pk = keys_ref[0]                    # (C, N)
    w1 = w1_ref[...]                    # (out_dim, C)
    w21 = w21_ref[...]                  # (out_dim, C)
    c, tm = pq.shape
    n = pk.shape[1]
    f32 = jnp.float32

    # Ranking distance d[j, i] = ||k_j||^2 - 2 k_j . q_i
    # (||q_i||^2 is constant per query column -> dropped, ranking unchanged).
    sqk = lax.dot_general(pk * pk, jnp.ones((c, 1), pk.dtype),
                          (((0,), (0,)), ((), ())),
                          preferred_element_type=f32)                  # (N, 1)
    inner = lax.dot_general(pk, pq, (((0,), (0,)), ((), ())),
                            preferred_element_type=f32)                # (N, TM)
    d = sqk - 2.0 * inner                                              # (N, TM)

    # Conv hoisted out of the k-loop via max distribution.
    p1 = lax.dot_general(w1, pk, (((1,), (0,)), ((), ())),
                         preferred_element_type=f32)                   # (out_dim, N)
    c0 = lax.dot_general(w21, pq, (((1,), (0,)), ((), ())),
                         preferred_element_type=f32)                   # (out_dim, TM)

    # Self-neighbor contribution computed directly (skip loop iteration 0).
    maxout = lax.dot_general(w1, pq, (((1,), (0,)), ((), ())),
                             preferred_element_type=f32)               # (out_dim, TM)

    p1g = p1.astype(gather_dtype)

    # (N,1) + (1,TM) iotas instead of a resident (N,TM) int32 panel.
    row_ids = lax.broadcasted_iota(jnp.int32, (n, 1), 0)               # (N, 1)
    col_ids = (pl.program_id(1) * tm
               + lax.broadcasted_iota(jnp.int32, (1, tm), 1))          # (1, TM)
    d = jnp.where(row_ids == col_ids, jnp.inf, d)                      # mask self

    def body(_, carry):
        d, maxout = carry
        # Nearest remaining neighbor per query column (ties -> lowest index);
        # reductions run over the sublane (neighbor) axis.
        minval = jnp.min(d, axis=0, keepdims=True)                     # (1, TM)
        is_min = d <= minval
        jmin = jnp.min(jnp.where(is_min, row_ids, n), axis=0,
                       keepdims=True)                                  # (1, TM)
        sel = row_ids == jmin                                          # (N, TM)
        onehot = sel.astype(gather_dtype)
        # Gather the selected P1 columns: deep (N) MXU contraction.
        gathered = lax.dot_general(p1g, onehot, (((1,), (0,)), ((), ())),
                                   preferred_element_type=f32)         # (out_dim, TM)
        maxout = jnp.maximum(maxout, gathered)
        d = jnp.where(sel, jnp.inf, d)   # reuse sel to mask the picked neighbor
        return d, maxout

    trip = k - 1
    if trip > 0:
        if trip <= 8:
            # Full unroll: straight-line code lets the scheduler overlap the
            # iter-t one-hot gather (MXU) with the iter-(t+1) argmin (VPU).
            carry = (d, maxout)
            for _ in range(trip):
                carry = body(0, carry)
            maxout = carry[1]
        else:
            # Partial unroll bounds vreg/VMEM live-range growth at large k.
            _, maxout = lax.fori_loop(0, trip, body, (d, maxout), unroll=4)

    o_ref[0] = (maxout + c0).astype(o_ref.dtype)


def _default_tm(n):
    # Lane-aligned query tile; 256 keeps the (N, TM) f32 panels comfortably
    # within default scoped VMEM on v5e/v7x while still giving the gather
    # matmul 256 result columns per weight-stationary MXU pass.
    if n <= 256:
        return n
    return 256


def _estimate_vmem_bytes(c, n_keys, tm, out_dim, itemsize):
    f32 = 4
    io = (2 * (c * tm + c * n_keys + out_dim * tm) * itemsize   # dbl-buffered blocks
          + 2 * 2 * out_dim * c * itemsize)                      # weights
    panels = (4 * n_keys * tm * f32          # d + select / one-hot / where temps
              + out_dim * n_keys * f32       # p1
              + 3 * out_dim * tm * f32)      # c0, maxout, gathered
    return io + panels


def edge_conv(x, conv_weight, k, *, tm=None):
    """x: [bs, in_dim, num_corr]; conv_weight: [out_dim, 2*in_dim, 1, 1].

    Returns [bs, out_dim, num_corr] (same layout as the PyTorch module).
    """
    bs, c, n = x.shape
    out_dim = conv_weight.shape[0]
    assert conv_weight.shape[1] == 2 * c
    assert 1 <= k <= n, "EdgeConv requires 1 <= k <= num_corr"

    if tm is None:
        tm = _default_tm(n)
    tm = min(tm, n)

    n_tiles = -(-n // tm)
    n_pad = n_tiles * tm
    assert tm == n_pad or tm % 128 == 0, (
        "query tile must be lane-aligned (multiple of 128) or cover the array")

    # Pad only the query/output axis; keys stay un-padded so kNN is unchanged.
    x_q = x if n_pad == n else jnp.pad(x, ((0, 0), (0, 0), (0, n_pad - n)))

    # bf16 inputs keep bf16 MXU feeds (one-hot gather is exact in bf16);
    # f32 inputs stay on the exact f32 path to preserve reference tolerance.
    gather_dtype = jnp.bfloat16 if x.dtype == jnp.bfloat16 else jnp.float32

    w = conv_weight.reshape(out_dim, 2 * c).astype(x.dtype)
    w1 = w[:, :c]            # applies to (x_j - x_i)
    w21 = w[:, c:] - w1      # applies to x_i after max-distribution

    itemsize = jnp.dtype(x.dtype).itemsize
    est = _estimate_vmem_bytes(c, n, tm, out_dim, itemsize)
    vmem_limit = int(min(96 * 2 ** 20, max(32 * 2 ** 20, 1.25 * est)))

    flops = bs * n_tiles * (2 * c * n * tm
                            + 2 * out_dim * c * (n + 2 * tm)
                            + 2 * out_dim * n * tm * max(k - 1, 0))
    bytes_accessed = (bs * n_tiles * c * n + bs * c * n_pad
                      + bs * out_dim * n_pad + 2 * out_dim * c) * itemsize
    cost = pl.CostEstimate(flops=int(flops), transcendentals=0,
                           bytes_accessed=int(bytes_accessed))

    out = pl.pallas_call(
        functools.partial(edgeconv_kernel, k=k, gather_dtype=gather_dtype),
        out_shape=jax.ShapeDtypeStruct((bs, out_dim, n_pad), x.dtype),
        grid_spec=pltpu.PrefetchScalarGridSpec(
            num_scalar_prefetch=0,
            grid=(bs, n_tiles),
            in_specs=[
                pl.BlockSpec((1, c, tm), lambda b, i: (b, 0, i)),    # queries
                pl.BlockSpec((1, c, n), lambda b, i: (b, 0, 0)),     # keys (full)
                pl.BlockSpec((out_dim, c), lambda b, i: (0, 0)),     # W1
                pl.BlockSpec((out_dim, c), lambda b, i: (0, 0)),     # W2 - W1
            ],
            out_specs=pl.BlockSpec((1, out_dim, tm), lambda b, i: (b, 0, i)),
        ),
        compiler_params=pltpu.CompilerParams(
            dimension_semantics=("parallel", "parallel"),
            vmem_limit_bytes=vmem_limit),
        cost_estimate=cost,
    )(x_q, x, w1, w21)

    if n_pad != n:
        out = out[:, :, :n]
    return out


def edge_conv_ref(x, conv_weight, k):
    """Pure-JAX reference mirroring the PyTorch forward."""
    bs, in_dim, n = x.shape
    out_dim = conv_weight.shape[0]
    w2d = conv_weight.reshape(out_dim, 2 * in_dim)
    xt = jnp.transpose(x, (0, 2, 1))                              # [bs, n, c]
    inner = 2.0 * jnp.einsum('bnc,bmc->bnm', xt, xt)
    xx = jnp.sum(xt ** 2, axis=-1, keepdims=True)
    d = xx - inner + jnp.transpose(xx, (0, 2, 1))
    idx = lax.top_k(-d, k)[1]                                     # [bs, n, k]
    feats = jax.vmap(lambda pts, ids: pts[ids])(xt, idx)          # [bs, n, k, c]
    center = jnp.broadcast_to(xt[:, :, None, :], feats.shape)
    edge = jnp.concatenate([feats - center, center], axis=-1)     # [bs, n, k, 2c]
    out = jnp.einsum('bnke,oe->bnko', edge, w2d)                  # [bs, n, k, o]
    out = jnp.max(out, axis=2)                                    # [bs, n, o]
    return jnp.transpose(out, (0, 2, 1))                          # [bs, o, n]


if __name__ == "__main__":
    bs, in_dim, num_corr = 2, 4, 16
    out_dim, k = 8, 4

    key = jax.random.PRNGKey(0)
    kx, kw = jax.random.split(key)
    x = jax.random.normal(kx, (bs, in_dim, num_corr), dtype=jnp.float32)
    # Conv2d(in_dim*2, out_dim, kernel_size=1, bias=False) weight, deterministic init.
    conv_weight = jax.random.normal(kw, (out_dim, 2 * in_dim, 1, 1),
                                    dtype=jnp.float32) * (1.0 / (2 * in_dim) ** 0.5)

    out = jax.block_until_ready(edge_conv(x, conv_weight, k))

    ref = edge_conv_ref(x, conv_weight, k)
    assert out.shape == (bs, out_dim, num_corr)
    assert jnp.allclose(out, ref, rtol=1e-4, atol=1e-4), (
        f"max abs diff = {jnp.max(jnp.abs(out - ref))}")

    print("KERNEL_OK")
</pallas_src>

<mosaic_0001>
module attributes {stable_mosaic.version = 11 : i64} {
  func.func @edgeconv_kernel(%arg0: i32, %arg1: i32, %arg2: memref<1x4x16xf32, #tpu.memory_space<vmem>>, %arg3: memref<1x4x16xf32, #tpu.memory_space<vmem>>, %arg4: memref<8x4xf32, #tpu.memory_space<vmem>>, %arg5: memref<8x4xf32, #tpu.memory_space<vmem>>, %arg6: memref<1x8x16xf32, #tpu.memory_space<vmem>>) attributes {dimension_semantics = [#tpu.dimension_semantics<parallel>, #tpu.dimension_semantics<parallel>], iteration_bounds = array<i64: 2, 1>, scalar_prefetch = 0 : i64, scratch_operands = 0 : i64, tpu.core_type = #tpu.core_type<tc>, window_params = [{transform_indices = @transform_0, window_bounds = array<i64: 1, 4, 16>}, {transform_indices = @transform_1, window_bounds = array<i64: 1, 4, 16>}, {pipeline_mode = #tpu.pipeline_mode<synchronous>, transform_indices = @transform_2, window_bounds = array<i64: 8, 4>}, {pipeline_mode = #tpu.pipeline_mode<synchronous>, transform_indices = @transform_3, window_bounds = array<i64: 8, 4>}, {transform_indices = @transform_4, window_bounds = array<i64: 1, 8, 16>}]} {
    %c0 = arith.constant 0 : index
    %c0_0 = arith.constant 0 : index
    %c0_1 = arith.constant 0 : index
    %0 = vector.load %arg2[%c0, %c0_0, %c0_1] : memref<1x4x16xf32, #tpu.memory_space<vmem>>, vector<1x4x16xf32>
    %1 = vector.shape_cast %0 : vector<1x4x16xf32> to vector<4x16xf32>
    %c0_2 = arith.constant 0 : index
    %c0_3 = arith.constant 0 : index
    %c0_4 = arith.constant 0 : index
    %2 = vector.load %arg3[%c0_2, %c0_3, %c0_4] : memref<1x4x16xf32, #tpu.memory_space<vmem>>, vector<1x4x16xf32>
    %3 = vector.shape_cast %2 : vector<1x4x16xf32> to vector<4x16xf32>
    %c0_5 = arith.constant 0 : index
    %c0_6 = arith.constant 0 : index
    %4 = vector.load %arg4[%c0_5, %c0_6] : memref<8x4xf32, #tpu.memory_space<vmem>>, vector<8x4xf32>
    %c0_7 = arith.constant 0 : index
    %c0_8 = arith.constant 0 : index
    %5 = vector.load %arg5[%c0_7, %c0_8] : memref<8x4xf32, #tpu.memory_space<vmem>>, vector<8x4xf32>
    %6 = arith.mulf %3, %3 : vector<4x16xf32>
    %cst = arith.constant 1.000000e+00 : f32
    %7 = vector.broadcast %cst : f32 to vector<4x1xf32>
    %cst_9 = arith.constant dense<0.000000e+00> : vector<16x1xf32>
    %8 = tpu.matmul %6, %7, %cst_9 {dimension_numbers = #tpu.dot_dimension_numbers<[0], [0], [1], [1], [0, 1, 1, 1], [], []>} : vector<4x16xf32>, vector<4x1xf32>, vector<16x1xf32> -> vector<16x1xf32>
    %cst_10 = arith.constant dense<0.000000e+00> : vector<16x16xf32>
    %9 = tpu.matmul %3, %1, %cst_10 {dimension_numbers = #tpu.dot_dimension_numbers<[0], [0], [1], [1], [0, 1, 1, 1], [], []>} : vector<4x16xf32>, vector<4x16xf32>, vector<16x16xf32> -> vector<16x16xf32>
    %cst_11 = arith.constant 2.000000e+00 : f32
    %10 = vector.broadcast %cst_11 : f32 to vector<16x16xf32>
    %11 = arith.mulf %10, %9 : vector<16x16xf32>
    %12 = vector.broadcast %8 : vector<16x1xf32> to vector<16x16xf32>
    %13 = arith.subf %12, %11 : vector<16x16xf32>
    %cst_12 = arith.constant dense<0.000000e+00> : vector<8x16xf32>
    %14 = tpu.matmul %4, %3, %cst_12 {dimension_numbers = #tpu.dot_dimension_numbers<[1], [0], [0], [1], [0, 0, 1, 1], [], []>} : vector<8x4xf32>, vector<4x16xf32>, vector<8x16xf32> -> vector<8x16xf32>
    %cst_13 = arith.constant dense<0.000000e+00> : vector<8x16xf32>
    %15 = tpu.matmul %5, %1, %cst_13 {dimension_numbers = #tpu.dot_dimension_numbers<[1], [0], [0], [1], [0, 0, 1, 1], [], []>} : vector<8x4xf32>, vector<4x16xf32>, vector<8x16xf32> -> vector<8x16xf32>
    %cst_14 = arith.constant dense<0.000000e+00> : vector<8x16xf32>
    %16 = tpu.matmul %4, %1, %cst_14 {dimension_numbers = #tpu.dot_dimension_numbers<[1], [0], [0], [1], [0, 0, 1, 1], [], []>} : vector<8x4xf32>, vector<4x16xf32>, vector<8x16xf32> -> vector<8x16xf32>
    %17 = tpu.iota {dimensions = array<i32: 0>} : vector<16x1xi32>
    %c16_i32 = arith.constant 16 : i32
    %18 = arith.muli %arg1, %c16_i32 : i32
    %19 = tpu.iota {dimensions = array<i32: 1>} : vector<1x16xi32>
    %20 = vector.broadcast %18 : i32 to vector<1x16xi32>
    %21 = arith.addi %20, %19 : vector<1x16xi32>
    %22 = vector.broadcast %17 : vector<16x1xi32> to vector<16x16xi32>
    %23 = vector.broadcast %21 : vector<1x16xi32> to vector<16x16xi32>
    %24 = arith.cmpi eq, %22, %23 : vector<16x16xi32>
    %cst_15 = arith.constant 0x7F800000 : f32
    %25 = vector.broadcast %cst_15 : f32 to vector<16x16xf32>
    %26 = arith.select %24, %25, %13 : vector<16x16xi1>, vector<16x16xf32>
    %cst_16 = arith.constant dense<0x7F800000> : vector<16xf32>
    %27 = vector.multi_reduction <minimumf>, %26, %cst_16 [0] : vector<16x16xf32> to vector<16xf32>
    %28 = vector.shape_cast %27 : vector<16xf32> to vector<1x16xf32>
    %29 = vector.broadcast %28 : vector<1x16xf32> to vector<16x16xf32>
    %30 = arith.cmpf ole, %26, %29 : vector<16x16xf32>
    %c16_i32_17 = arith.constant 16 : i32
    %31 = vector.shape_cast %17 : vector<16x1xi32> to vector<16x1xi32>
    %32 = vector.broadcast %31 : vector<16x1xi32> to vector<16x16xi32>
    %33 = vector.broadcast %c16_i32_17 : i32 to vector<16x16xi32>
    %34 = arith.select %30, %32, %33 : vector<16x16xi1>, vector<16x16xi32>
    %cst_18 = arith.constant dense<2147483647> : vector<16xi32>
    %35 = vector.multi_reduction <minsi>, %34, %cst_18 [0] : vector<16x16xi32> to vector<16xi32>
    %36 = vector.shape_cast %35 : vector<16xi32> to vector<1x16xi32>
    %37 = vector.broadcast %17 : vector<16x1xi32> to vector<16x16xi32>
    %38 = vector.broadcast %36 : vector<1x16xi32> to vector<16x16xi32>
    %39 = arith.cmpi eq, %37, %38 : vector<16x16xi32>
    %40 = arith.extui %39 : vector<16x16xi1> to vector<16x16xi32>
    %41 = arith.sitofp %40 : vector<16x16xi32> to vector<16x16xf32>
    %cst_19 = arith.constant dense<0.000000e+00> : vector<8x16xf32>
    %42 = tpu.matmul %14, %41, %cst_19 {dimension_numbers = #tpu.dot_dimension_numbers<[1], [0], [0], [1], [0, 0, 1, 1], [], []>} : vector<8x16xf32>, vector<16x16xf32>, vector<8x16xf32> -> vector<8x16xf32>
    %43 = arith.maximumf %16, %42 : vector<8x16xf32>
    %cst_20 = arith.constant 0x7F800000 : f32
    %44 = vector.broadcast %cst_20 : f32 to vector<16x16xf32>
    %45 = arith.select %39, %44, %26 : vector<16x16xi1>, vector<16x16xf32>
    %cst_21 = arith.constant dense<0x7F800000> : vector<16xf32>
    %46 = vector.multi_reduction <minimumf>, %45, %cst_21 [0] : vector<16x16xf32> to vector<16xf32>
    %47 = vector.shape_cast %46 : vector<16xf32> to vector<1x16xf32>
    %48 = vector.broadcast %47 : vector<1x16xf32> to vector<16x16xf32>
    %49 = arith.cmpf ole, %45, %48 : vector<16x16xf32>
    %c16_i32_22 = arith.constant 16 : i32
    %50 = vector.shape_cast %17 : vector<16x1xi32> to vector<16x1xi32>
    %51 = vector.broadcast %50 : vector<16x1xi32> to vector<16x16xi32>
    %52 = vector.broadcast %c16_i32_22 : i32 to vector<16x16xi32>
    %53 = arith.select %49, %51, %52 : vector<16x16xi1>, vector<16x16xi32>
    %cst_23 = arith.constant dense<2147483647> : vector<16xi32>
    %54 = vector.multi_reduction <minsi>, %53, %cst_23 [0] : vector<16x16xi32> to vector<16xi32>
    %55 = vector.shape_cast %54 : vector<16xi32> to vector<1x16xi32>
    %56 = vector.broadcast %17 : vector<16x1xi32> to vector<16x16xi32>
    %57 = vector.broadcast %55 : vector<1x16xi32> to vector<16x16xi32>
    %58 = arith.cmpi eq, %56, %57 : vector<16x16xi32>
    %59 = arith.extui %58 : vector<16x16xi1> to vector<16x16xi32>
    %60 = arith.sitofp %59 : vector<16x16xi32> to vector<16x16xf32>
    %cst_24 = arith.constant dense<0.000000e+00> : vector<8x16xf32>
    %61 = tpu.matmul %14, %60, %cst_24 {dimension_numbers = #tpu.dot_dimension_numbers<[1], [0], [0], [1], [0, 0, 1, 1], [], []>} : vector<8x16xf32>, vector<16x16xf32>, vector<8x16xf32> -> vector<8x16xf32>
    %62 = arith.maximumf %43, %61 : vector<8x16xf32>
    %cst_25 = arith.constant 0x7F800000 : f32
    %63 = vector.broadcast %cst_25 : f32 to vector<16x16xf32>
    %64 = arith.select %58, %63, %45 : vector<16x16xi1>, vector<16x16xf32>
    %cst_26 = arith.constant dense<0x7F800000> : vector<16xf32>
    %65 = vector.multi_reduction <minimumf>, %64, %cst_26 [0] : vector<16x16xf32> to vector<16xf32>
    %66 = vector.shape_cast %65 : vector<16xf32> to vector<1x16xf32>
    %67 = vector.broadcast %66 : vector<1x16xf32> to vector<16x16xf32>
    %68 = arith.cmpf ole, %64, %67 : vector<16x16xf32>
    %c16_i32_27 = arith.constant 16 : i32
    %69 = vector.shape_cast %17 : vector<16x1xi32> to vector<16x1xi32>
    %70 = vector.broadcast %69 : vector<16x1xi32> to vector<16x16xi32>
    %71 = vector.broadcast %c16_i32_27 : i32 to vector<16x16xi32>
    %72 = arith.select %68, %70, %71 : vector<16x16xi1>, vector<16x16xi32>
    %cst_28 = arith.constant dense<2147483647> : vector<16xi32>
    %73 = vector.multi_reduction <minsi>, %72, %cst_28 [0] : vector<16x16xi32> to vector<16xi32>
    %74 = vector.shape_cast %73 : vector<16xi32> to vector<1x16xi32>
    %75 = vector.broadcast %17 : vector<16x1xi32> to vector<16x16xi32>
    %76 = vector.broadcast %74 : vector<1x16xi32> to vector<16x16xi32>
    %77 = arith.cmpi eq, %75, %76 : vector<16x16xi32>
    %78 = arith.extui %77 : vector<16x16xi1> to vector<16x16xi32>
    %79 = arith.sitofp %78 : vector<16x16xi32> to vector<16x16xf32>
    %cst_29 = arith.constant dense<0.000000e+00> : vector<8x16xf32>
    %80 = tpu.matmul %14, %79, %cst_29 {dimension_numbers = #tpu.dot_dimension_numbers<[1], [0], [0], [1], [0, 0, 1, 1], [], []>} : vector<8x16xf32>, vector<16x16xf32>, vector<8x16xf32> -> vector<8x16xf32>
    %81 = arith.maximumf %62, %80 : vector<8x16xf32>
    %82 = arith.addf %81, %15 : vector<8x16xf32>
    %c0_30 = arith.constant 0 : index
    %c0_31 = arith.constant 0 : index
    %c0_32 = arith.constant 0 : index
    %83 = vector.load %arg6[%c0_30, %c0_31, %c0_32] : memref<1x8x16xf32, #tpu.memory_space<vmem>>, vector<1x8x16xf32>
    %84 = vector.shape_cast %83 : vector<1x8x16xf32> to vector<8x16xf32>
    %85 = vector.shape_cast %82 : vector<8x16xf32> to vector<1x8x16xf32>
    tpu.vector_store %arg6[%c0_30, %c0_31, %c0_32], %85 {strides = array<i32>} : memref<1x8x16xf32, #tpu.memory_space<vmem>>, vector<1x8x16xf32>,
    return
  }
  func.func @transform_0(%arg0: i32, %arg1: i32) -> (i32, i32, i32) {
    %c0_i32 = arith.constant 0 : i32
    %c0_i32_0 = arith.constant 0 : i32
    return %arg0, %c0_i32, %arg1 : i32, i32, i32
  }
  func.func @transform_1(%arg0: i32, %arg1: i32) -> (i32, i32, i32) {
    %c0_i32 = arith.constant 0 : i32
    %c0_i32_0 = arith.constant 0 : i32
    %c0_i32_1 = arith.constant 0 : i32
    return %arg0, %c0_i32, %c0_i32_0 : i32, i32, i32
  }
  func.func @transform_2(%arg0: i32, %arg1: i32) -> (i32, i32) {
    %c0_i32 = arith.constant 0 : i32
    %c0_i32_0 = arith.constant 0 : i32
    %c0_i32_1 = arith.constant 0 : i32
    return %c0_i32, %c0_i32_0 : i32, i32
  }
  func.func @transform_3(%arg0: i32, %arg1: i32) -> (i32, i32) {
    %c0_i32 = arith.constant 0 : i32
    %c0_i32_0 = arith.constant 0 : i32
    %c0_i32_1 = arith.constant 0 : i32
    return %c0_i32, %c0_i32_0 : i32, i32
  }
  func.func @transform_4(%arg0: i32, %arg1: i32) -> (i32, i32, i32) {
    %c0_i32 = arith.constant 0 : i32
    %c0_i32_0 = arith.constant 0 : i32
    return %arg0, %c0_i32, %arg1 : i32, i32, i32
  }
}

</mosaic_0001>

<llo_original>
// kernel: tpu_custom_call.1
$region0: #{tpu_custom_call.1}
  #allocation0 [shape = 'u32[]', space=smem, size = 0x4, offset = 0x4, fixed_abs, tag = 'smem constant byte address 0x4 - core index']
  #allocation1 [shape = 'u32[72,128]{1,0:T(1,128)}', space=vmem, size = 0x9000, scoped, tag = 'internal scratch']
  %s0 = inlined_call_operand.vmem [shape: f32[2,4,16], index: 0, kind: input, shape index: {}]
  %s1 = inlined_call_operand.vmem [shape: f32[2,4,16], index: 1, kind: input, shape index: {}]
  %s2 = inlined_call_operand.vmem [shape: f32[8,4], index: 2, kind: input, shape index: {}]
  %s3 = inlined_call_operand.vmem [shape: f32[8,4], index: 3, kind: input, shape index: {}]
  %s4 = inlined_call_operand.hbm [shape: f32[2,8,16], index: 4, kind: output, shape index: {}]
  %s5 = sld [smem:[#allocation0]]
  $region49: #{tpu_custom_call.1} parent=0
    _
  %s7 = ssub.s32 1, %s5
  %s8 = scalar_select 0, %s7, %s5
  $region1: #{tpu_custom_call.1} parent=0
    #allocation2 [shape = 'u8[8192]{0}', space=vmem, size = 0x2000, scoped, tag = 'output window, operand 0']
    #allocation3 [shape = 's32[2]{0}', space=sflag, size = 0x8, scoped, tag = 'scoped memory for tpu_custom_call.1']
    %9 = vsyncpa [#allocation3], 0
    %s10 = scalar_lea.sflag [#allocation3], 1
    %11 = vsyncpa %s10, 0
    loop: start=0, step=1, limit=4
    $region2: #{tpu_custom_call.1} parent=1 // loop_pre_header
      _
    $region3: #{tpu_custom_call.1} parent=1 // loop_header
      %s13 = sphi 0, %s17
      %p14 = scmp.ge.s32.totalorder %s13, 4
      %s20 = sphi 0, %s32
      %s21 = sphi 0, %s28
      %s22 = sphi 0, %s20
      %s23 = sphi 0, %s21
      %s24 = sphi 0, %s22
      %s25 = sphi 0, %s23
      %s37 = sphi 0, %s39
      %s40 = sphi 0, %s37
      %s41 = sphi 0, %s40
      %s57 = sphi 0, %s41
      %s63 = sphi 0, %s65
      %s66 = sphi 0, %s63
      %s67 = sphi 0, %s66
      %s83 = sphi 0, %s67
      %s87 = sphi 0, %s87
      %s89 = sphi 0, %s87
      %s90 = sphi 0, %s89
      %s104 = sphi 0, %s90
      %s108 = sphi 0, %s108
      %s110 = sphi 0, %s108
      %s111 = sphi 0, %s110
      %s125 = sphi 0, %s111
      %s133 = sphi 0, %s135
      %s136 = sphi 0, %s133
      %s137 = sphi 0, %s136
      %s153 = sphi 0, %s137
    $region4: #{tpu_custom_call.1} parent=1 // loop_header_branch
      %16 = sbr.rel (%p14) target = $region8
    $region5: #{tpu_custom_call.1} parent=1 // loop_body
      %s18 = ssub.s32 %s13, 1
      %s19 = ssub.s32 %s13, 2
      %s26 = sadd.s32 1, %s21
      %p27 = scmp.ge.s32.totalorder %s26, 1
      %s28 = scalar_select %p27, 0, %s26
      %s29 = sadd.s32 1, %s20
      %s30 = scalar_select %p27, %s29, %s20
      %p31 = scmp.ge.s32.totalorder %s30, 2
      %s32 = scalar_select %p31, 0, %s30
      %s33 = ssub.s32 %s20, %s32
      %s34 = ssub.s32 %s21, %s28
      %s35 = sor.u32 %s33, %s34
      %p36 = scmp.eq.s32.totalorder %s35, 0
      %s38 = sadd.s32 %s37, 1
      %s39 = scalar_select %p36, %s37, %s38
      %p42 = pneg %p36
      %p43 = scmp.eq.s32.totalorder %s13, 1
      %p44 = por %p42, %p43
      %p45 = scmp.ne.s32.totalorder %s37, %s40
      %p46 = scmp.eq.s32.totalorder %s13, 0
      %p47 = por %p45, %p46
      %p48 = scmp.ne.s32.totalorder %s37, %s40
      %p49 = scmp.eq.s32.totalorder %s18, 1
      %p50 = por %p48, %p49
      %p51 = scmp.ne.s32.totalorder %s40, %s41
      %p52 = scmp.eq.s32.totalorder %s18, 0
      %p53 = por %p51, %p52
      %p54 = scmp.ne.s32.totalorder %s40, %s41
      %p55 = scmp.eq.s32.totalorder %s19, 1
      %p56 = por %p54, %p55
      %p58 = scmp.ne.s32.totalorder %s41, %s57
      %p59 = scmp.eq.s32.totalorder %s19, 0
      %p60 = por %p58, %p59
      %s61 = ssub.s32 %s20, %s32
      %p62 = scmp.eq.s32.totalorder %s61, 0
      %s64 = sadd.s32 %s63, 1
      %s65 = scalar_select %p62, %s63, %s64
      %p68 = pneg %p62
      %p69 = scmp.eq.s32.totalorder %s13, 1
      %p70 = por %p68, %p69
      %p71 = scmp.ne.s32.totalorder %s63, %s66
      %p72 = scmp.eq.s32.totalorder %s13, 0
      %p73 = por %p71, %p72
      %p74 = scmp.ne.s32.totalorder %s63, %s66
      %p75 = scmp.eq.s32.totalorder %s18, 1
      %p76 = por %p74, %p75
      %p77 = scmp.ne.s32.totalorder %s66, %s67
      %p78 = scmp.eq.s32.totalorder %s18, 0
      %p79 = por %p77, %p78
      %p80 = scmp.ne.s32.totalorder %s66, %s67
      %p81 = scmp.eq.s32.totalorder %s19, 1
      %p82 = por %p80, %p81
      %p84 = scmp.ne.s32.totalorder %s67, %s83
      %p85 = scmp.eq.s32.totalorder %s19, 0
      %p86 = por %p84, %p85
      %s88 = sadd.s32 %s87, 1
      %p91 = scmp.eq.s32.totalorder %s13, 1
      %p92 = scmp.ne.s32.totalorder %s87, %s89
      %p93 = scmp.eq.s32.totalorder %s13, 0
      %p94 = por %p92, %p93
      %p95 = scmp.ne.s32.totalorder %s87, %s89
      %p96 = scmp.eq.s32.totalorder %s18, 1
      %p97 = por %p95, %p96
      %p98 = scmp.ne.s32.totalorder %s89, %s90
      %p99 = scmp.eq.s32.totalorder %s18, 0
      %p100 = por %p98, %p99
      %p101 = scmp.ne.s32.totalorder %s89, %s90
      %p102 = scmp.eq.s32.totalorder %s19, 1
      %p103 = por %p101, %p102
      %p105 = scmp.ne.s32.totalorder %s90, %s104
      %p106 = scmp.eq.s32.totalorder %s19, 0
      %p107 = por %p105, %p106
      %s109 = sadd.s32 %s108, 1
      %p112 = scmp.eq.s32.totalorder %s13, 1
      %p113 = scmp.ne.s32.totalorder %s108, %s110
      %p114 = scmp.eq.s32.totalorder %s13, 0
      %p115 = por %p113, %p114
      %p116 = scmp.ne.s32.totalorder %s108, %s110
      %p117 = scmp.eq.s32.totalorder %s18, 1
      %p118 = por %p116, %p117
      %p119 = scmp.ne.s32.totalorder %s110, %s111
      %p120 = scmp.eq.s32.totalorder %s18, 0
      %p121 = por %p119, %p120
      %p122 = scmp.ne.s32.totalorder %s110, %s111
      %p123 = scmp.eq.s32.totalorder %s19, 1
      %p124 = por %p122, %p123
      %p126 = scmp.ne.s32.totalorder %s111, %s125
      %p127 = scmp.eq.s32.totalorder %s19, 0
      %p128 = por %p126, %p127
      %s129 = ssub.s32 %s20, %s32
      %s130 = ssub.s32 %s21, %s28
      %s131 = sor.u32 %s129, %s130
      %p132 = scmp.eq.s32.totalorder %s131, 0
      %s134 = sadd.s32 %s133, 1
      %s135 = scalar_select %p132, %s133, %s134
      %p138 = pneg %p132
      %p139 = scmp.eq.s32.totalorder %s13, 1
      %p140 = por %p138, %p139
      %p141 = scmp.ne.s32.totalorder %s133, %s136
      %p142 = scmp.eq.s32.totalorder %s13, 0
      %p143 = por %p141, %p142
      %p144 = scmp.ne.s32.totalorder %s133, %s136
      %p145 = scmp.eq.s32.totalorder %s18, 1
      %p146 = por %p144, %p145
      %p147 = scmp.ne.s32.totalorder %s136, %s137
      %p148 = scmp.eq.s32.totalorder %s18, 0
      %p149 = por %p147, %p148
      %p150 = scmp.ne.s32.totalorder %s136, %s137
      %p151 = scmp.eq.s32.totalorder %s19, 1
      %p152 = por %p150, %p151
      %p154 = scmp.ne.s32.totalorder %s137, %s153
      %p155 = scmp.eq.s32.totalorder %s19, 0
      %p156 = por %p154, %p155
      %p157 = scmp.le.s32.totalorder 1, %s13
      %p158 = scmp.lt.s32.totalorder %s13, 3
      %p159 = pnand %p157, %p158
      %p160 = pneg %p159
      // Predicated region
      $region9: #{tpu_custom_call.1} parent=5 // pred_check
        _
      $region10: #{tpu_custom_call.1} parent=5 // pred_check_branch
        %162 = sbr.rel (%p159) target = $region12
      $region11: #{tpu_custom_call.1} parent=5 // pred_region
        %s163 = ssub.s32 %s13, 1
        // Predicated region
        $region13: #{tpu_custom_call.1} parent=11 // pred_check
          %p164 = pneg %p100
        $region14: #{tpu_custom_call.1} parent=11 // pred_check_branch
          %166 = sbr.rel (%p164) target = $region16
        $region15: #{tpu_custom_call.1} parent=11 // pred_region
          _
        $region16: #{tpu_custom_call.1} parent=11 // pred_fallthru
          _
        // Predicated region
        $region17: #{tpu_custom_call.1} parent=11 // pred_check
          %p167 = pneg %p121
        $region18: #{tpu_custom_call.1} parent=11 // pred_check_branch
          %169 = sbr.rel (%p167) target = $region20
        $region19: #{tpu_custom_call.1} parent=11 // pred_region
          _
        $region20: #{tpu_custom_call.1} parent=11 // pred_fallthru
          _
      $region12: #{tpu_custom_call.1} parent=5 // pred_fallthru
        _
      %p170 = scmp.lt.s32.totalorder %s13, 2
      // Predicated region
      $region21: #{tpu_custom_call.1} parent=5 // pred_check
        %p171 = pneg %p170
      $region22: #{tpu_custom_call.1} parent=5 // pred_check_branch
        %173 = sbr.rel (%p171) target = $region24
      $region23: #{tpu_custom_call.1} parent=5 // pred_region
        // Predicated region
        $region25: #{tpu_custom_call.1} parent=23 // pred_check
          %p174 = pneg %p47
        $region26: #{tpu_custom_call.1} parent=23 // pred_check_branch
          %176 = sbr.rel (%p174) target = $region28
        $region27: #{tpu_custom_call.1} parent=23 // pred_region
          %p177 = scmp.lt.s32.totalorder %s20, 1
          %s178 = scalar_select %p177, %s20, 1
          %p179 = scmp.lt.s32.totalorder %s21, 0
          %s180 = scalar_select %p179, %s21, 0
          %s181 = sadd.s32 %s180, %s178
          %s182 = smul.addr %s181, 4
          %s183 = scalar_lea.vmem %s0, %s182
        $region28: #{tpu_custom_call.1} parent=23 // pred_fallthru
          _
        // Predicated region
        $region29: #{tpu_custom_call.1} parent=23 // pred_check
          %p184 = pneg %p73
        $region30: #{tpu_custom_call.1} parent=23 // pred_check_branch
          %186 = sbr.rel (%p184) target = $region32
        $region31: #{tpu_custom_call.1} parent=23 // pred_region
          %p187 = scmp.lt.s32.totalorder %s20, 1
          %s188 = scalar_select %p187, %s20, 1
          %s189 = smul.addr %s188, 4
          %s190 = scalar_lea.vmem %s1, %s189
        $region32: #{tpu_custom_call.1} parent=23 // pred_fallthru
          _
      $region24: #{tpu_custom_call.1} parent=5 // pred_fallthru
        _
      %p191 = scmp.le.s32.totalorder 1, %s13
      %p192 = scmp.lt.s32.totalorder %s13, 3
      %p193 = pnand %p191, %p192
      %p194 = pneg %p193
      // Predicated region
      $region33: #{tpu_custom_call.1} parent=5 // pred_check
        _
      $region34: #{tpu_custom_call.1} parent=5 // pred_check_branch
        %196 = sbr.rel (%p193) target = $region36
      $region35: #{tpu_custom_call.1} parent=5 // pred_region
        %s197 = ssub.s32 %s13, 1
        %p198 = scmp.lt.s32.totalorder %s22, 1
        %s199 = scalar_select %p198, %s22, 1
        %p200 = scmp.lt.s32.totalorder %s23, 0
        %s201 = scalar_select %p200, %s23, 0
        %s202 = sadd.s32 %s201, %s199
        %s203 = smul.addr %s202, 4
        %s204 = scalar_lea.vmem %s0, %s203
        %p205 = pneg %p53
        %p206 = pneg %p50
        %p207 = scmp.lt.s32.totalorder %s22, 1
        %s208 = scalar_select %p207, %s22, 1
        %s209 = smul.addr %s208, 4
        %s210 = scalar_lea.vmem %s1, %s209
        %p211 = pneg %p79
        %p212 = pneg %p76
        %p213 = pneg %p100
        %p214 = pneg %p97
        %p215 = pneg %p121
        %p216 = pneg %p118
        %p217 = pneg %p149
        %p218 = pneg %p146
        %s219 = sand.u32 %s136, 1
        %s220 = scalar_lea.sflag [#allocation3], %s219
        %s221 = sand.u32 %s136, 1
        %s222 = smul.addr %s221, 8
        %s223 = scalar_lea.vmem [#allocation2], %s222
        %p224 = scmp.lt.s32.totalorder %s22, 1
        %s225 = scalar_select %p224, %s22, 1
        %p226 = scmp.lt.s32.totalorder %s23, 0
        %s227 = scalar_select %p226, %s23, 0
        %s228 = sadd.s32 %s227, %s225
        %s229 = smul.addr %s228, 4
        %s230 = scalar_lea.vmem %s0, %s229
        %p231 = scmp.lt.s32.totalorder %s22, 1
        %s232 = scalar_select %p231, %s22, 1
        %s233 = smul.addr %s232, 4
        %s234 = scalar_lea.vmem %s1, %s233
        %v235 = vld [vmem:[%s230] sm:$0xf]
        %v236 = vld [vmem:[%s234] sm:$0xf]
        %v237 = vld [vmem:[%s2] sm:$0xff]
        %v238 = vld [vmem:[%s3] sm:$0xff]
        %v239 = vmul.f32 %v236, %v236
        %240 = vxpose.xlu0.b32.start [1/16] %v239, 128
        %241 = vxpose.xlu0.b32.cont [2/16] 0.0, 128
        %242 = vxpose.xlu0.b32.cont [3/16] 0.0, 128
        %243 = vxpose.xlu0.b32.cont [4/16] 0.0, 128
        %244 = vxpose.xlu0.b32.cont [5/16] 0.0, 128
        %245 = vxpose.xlu0.b32.cont [6/16] 0.0, 128
        %246 = vxpose.xlu0.b32.cont [7/16] 0.0, 128
        %247 = vxpose.xlu0.b32.cont [8/16] 0.0, 128
        %248 = vxpose.xlu0.b32.cont [9/16] 0.0, 128
        %249 = vxpose.xlu0.b32.cont [10/16] 0.0, 128
        %250 = vxpose.xlu0.b32.cont [11/16] 0.0, 128
        %251 = vxpose.xlu0.b32.cont [12/16] 0.0, 128
        %252 = vxpose.xlu0.b32.cont [13/16] 0.0, 128
        %253 = vxpose.xlu0.b32.cont [14/16] 0.0, 128
        %254 = vxpose.xlu0.b32.cont [15/16] 0.0, 128
        %255 = vxpose.xlu0.b32.end [16/16] 0.0, 128
        %v256 = vpop.trf.xlu0
        %v257 = vpop.trf.xlu0
        %v258 = vpop.trf.xlu0
        %v259 = vpop.trf.xlu0
        %v260 = vpop.trf.xlu0
        %v261 = vpop.trf.xlu0
        %v262 = vpop.trf.xlu0
        %v263 = vpop.trf.xlu0
        %v264 = vpop.trf.xlu0
        %v265 = vpop.trf.xlu0
        %v266 = vpop.trf.xlu0
        %v267 = vpop.trf.xlu0
        %v268 = vpop.trf.xlu0
        %v269 = vpop.trf.xlu0
        %v270 = vpop.trf.xlu0
        %v271 = vpop.trf.xlu0
        %vm272 = vcmask 31744
        %v274 = vsel %vm272, %v256, 0
        %v277 = vsel %vm272, %v257, 0
        %vm279 = vcmask 1043456
        %v281 = vsel %vm279, 1.0, 0
        %283 = vmatpush.msra.mxu0 0.0
        %284 = vmatpush.msra.mxu0 0.0
        %285 = vmatpush.msra.mxu0 0.0
        %286 = vmatpush.msra.mxu0 0.0
        %287 = vmatpush.msra.mxu0 0.0
        %288 = vmatpush.msra.mxu0 0.0
        %289 = vmatpush.msra.mxu0 0.0
        %290 = vmatpush.msra.mxu0 0.0
        %291 = vmatpush.msra.mxu0 0.0
        %292 = vmatpush.msra.mxu0 0.0
        %293 = vmatpush.msra.mxu0 0.0
        %294 = vmatpush.msra.mxu0 0.0
        %295 = vmatpush.msra.mxu0 0.0
        %296 = vmatpush.msra.mxu0 0.0
        %297 = vmatpush.msra.mxu0 0.0
        %298 = vmatpush.msra.mxu0 %v281
        %299 = vmatmul.f32.gmra.mxu0 %v274
        %v300 = vpop.f32.mrf.mxu0
        %v301 = vadd.f32 0.0, %v300
        %302 = vmatmul.f32.gmra.mxu0 %v277
        %v303 = vpop.f32.mrf.mxu0
        %v304 = vadd.f32 0.0, %v303
        %305 = vdwg.mxu0
        %306 = vxpose.xlu0.b32.start [1/16] %v236, 128
        %307 = vxpose.xlu0.b32.cont [2/16] 0.0, 128
        %308 = vxpose.xlu0.b32.cont [3/16] 0.0, 128
        %309 = vxpose.xlu0.b32.cont [4/16] 0.0, 128
        %310 = vxpose.xlu0.b32.cont [5/16] 0.0, 128
        %311 = vxpose.xlu0.b32.cont [6/16] 0.0, 128
        %312 = vxpose.xlu0.b32.cont [7/16] 0.0, 128
        %313 = vxpose.xlu0.b32.cont [8/16] 0.0, 128
        %314 = vxpose.xlu0.b32.cont [9/16] 0.0, 128
        %315 = vxpose.xlu0.b32.cont [10/16] 0.0, 128
        %316 = vxpose.xlu0.b32.cont [11/16] 0.0, 128
        %317 = vxpose.xlu0.b32.cont [12/16] 0.0, 128
        %318 = vxpose.xlu0.b32.cont [13/16] 0.0, 128
        %319 = vxpose.xlu0.b32.cont [14/16] 0.0, 128
        %320 = vxpose.xlu0.b32.cont [15/16] 0.0, 128
        %321 = vxpose.xlu0.b32.end [16/16] 0.0, 128
        %v322 = vpop.trf.xlu0
        %v323 = vpop.trf.xlu0
        %v324 = vpop.trf.xlu0
        %v325 = vpop.trf.xlu0
        %v326 = vpop.trf.xlu0
        %v327 = vpop.trf.xlu0
        %v328 = vpop.trf.xlu0
        %v329 = vpop.trf.xlu0
        %v330 = vpop.trf.xlu0
        %v331 = vpop.trf.xlu0
        %v332 = vpop.trf.xlu0
        %v333 = vpop.trf.xlu0
        %v334 = vpop.trf.xlu0
        %v335 = vpop.trf.xlu0
        %v336 = vpop.trf.xlu0
        %v337 = vpop.trf.xlu0
        %v339 = vsel %vm272, %v322, 0
        %v342 = vsel %vm272, %v323, 0
        %v345 = vsel %vm279, %v235, 0
        %347 = vmatpush.msra.mxu0 0.0
        %348 = vmatpush.msra.mxu0 0.0
        %349 = vmatpush.msra.mxu0 0.0
        %350 = vmatpush.msra.mxu0 0.0
        %351 = vmatpush.msra.mxu0 0.0
        %352 = vmatpush.msra.mxu0 0.0
        %353 = vmatpush.msra.mxu0 0.0
        %354 = vmatpush.msra.mxu0 0.0
        %355 = vmatpush.msra.mxu0 0.0
        %356 = vmatpush.msra.mxu0 0.0
        %357 = vmatpush.msra.mxu0 0.0
        %358 = vmatpush.msra.mxu0 0.0
        %359 = vmatpush.msra.mxu0 0.0
        %360 = vmatpush.msra.mxu0 0.0
        %361 = vmatpush.msra.mxu0 0.0
        %362 = vmatpush.msra.mxu0 %v345
        %363 = vmatmul.f32.gmra.mxu0 %v339
        %v364 = vpop.f32.mrf.mxu0
        %v365 = vadd.f32 0.0, %v364
        %366 = vmatmul.f32.gmra.mxu0 %v342
        %v367 = vpop.f32.mrf.mxu0
        %v368 = vadd.f32 0.0, %v367
        %369 = vdwg.mxu0
        %v370 = vmul.f32 %v365, 2.0
        %v371 = vmul.f32 %v368, 2.0
        %373 = vset.pattern.permute.xlu0 0
        %374 = vperm.xlu0 %373, %v301
        %v375 = vpop.permute.xlu0 %374
        %378 = vset.pattern.permute.xlu0 0
        %379 = vperm.xlu0 %378, %v304
        %v380 = vpop.permute.xlu0 %379
        %v382 = vsub.f32 %v375, %v370
        %v383 = vsub.f32 %v380, %v371
        %v385 = vsel %vm272, %v237, 0
        %v388 = vsel %vm279, %v236, 0
        %390 = vmatpush.msra.mxu0 0.0
        %391 = vmatpush.msra.mxu0 0.0
        %392 = vmatpush.msra.mxu0 0.0
        %393 = vmatpush.msra.mxu0 0.0
        %394 = vmatpush.msra.mxu0 0.0
        %395 = vmatpush.msra.mxu0 0.0
        %396 = vmatpush.msra.mxu0 0.0
        %397 = vmatpush.msra.mxu0 0.0
        %398 = vmatpush.msra.mxu0 0.0
        %399 = vmatpush.msra.mxu0 0.0
        %400 = vmatpush.msra.mxu0 0.0
        %401 = vmatpush.msra.mxu0 0.0
        %402 = vmatpush.msra.mxu0 0.0
        %403 = vmatpush.msra.mxu0 0.0
        %404 = vmatpush.msra.mxu0 0.0
        %405 = vmatpush.msra.mxu0 %v388
        %406 = vmatmul.f32.gmra.mxu0 %v385
        %v407 = vpop.f32.mrf.mxu0
        %v408 = vadd.f32 0.0, %v407
        %409 = vdwg.mxu0
        %v411 = vsel %vm272, %v238, 0
        %413 = vmatpush.msra.mxu0 0.0
        %414 = vmatpush.msra.mxu0 0.0
        %415 = vmatpush.msra.mxu0 0.0
        %416 = vmatpush.msra.mxu0 0.0
        %417 = vmatpush.msra.mxu0 0.0
        %418 = vmatpush.msra.mxu0 0.0
        %419 = vmatpush.msra.mxu0 0.0
        %420 = vmatpush.msra.mxu0 0.0
        %421 = vmatpush.msra.mxu0 0.0
        %422 = vmatpush.msra.mxu0 0.0
        %423 = vmatpush.msra.mxu0 0.0
        %424 = vmatpush.msra.mxu0 0.0
        %425 = vmatpush.msra.mxu0 0.0
        %426 = vmatpush.msra.mxu0 0.0
        %427 = vmatpush.msra.mxu0 0.0
        %428 = vmatpush.msra.mxu0 %v345
        %429 = vmatmul.f32.gmra.mxu0 %v411
        %v430 = vpop.f32.mrf.mxu0
        %v431 = vadd.f32 0.0, %v430
        %432 = vdwg.mxu0
        %433 = vmatpush.msra.mxu0 0.0
        %434 = vmatpush.msra.mxu0 0.0
        %435 = vmatpush.msra.mxu0 0.0
        %436 = vmatpush.msra.mxu0 0.0
        %437 = vmatpush.msra.mxu0 0.0
        %438 = vmatpush.msra.mxu0 0.0
        %439 = vmatpush.msra.mxu0 0.0
        %440 = vmatpush.msra.mxu0 0.0
        %441 = vmatpush.msra.mxu0 0.0
        %442 = vmatpush.msra.mxu0 0.0
        %443 = vmatpush.msra.mxu0 0.0
        %444 = vmatpush.msra.mxu0 0.0
        %445 = vmatpush.msra.mxu0 0.0
        %446 = vmatpush.msra.mxu0 0.0
        %447 = vmatpush.msra.mxu0 0.0
        %448 = vmatpush.msra.mxu0 %v345
        %449 = vmatmul.f32.gmra.mxu0 %v385
        %v450 = vpop.f32.mrf.mxu0
        %v451 = vadd.f32 0.0, %v450
        %452 = vdwg.mxu0
        %v453 = vlaneseq
        %v454 = vshrl.u32 %v453, 7
        %v455 = vadd.s32 %v454, 8
        %s456 = smul.u32 %s23, 16
        %v457 = vlaneseq
        %v458 = vand.u32 %v457, 127
        %v459 = vstv %s456
        %v460 = vadd.s32 %v459, %v458
        %vm461 = vcmp.eq.s32.totalorder %v454, %v460
        %vm462 = vcmp.eq.s32.totalorder %v455, %v460
        %v463 = vsel %vm461, inf, %v382
        %v464 = vsel %vm462, inf, %v383
        %vm465 = vcmask 130048
        %v466 = vsel %vm465, %v463, inf
        %v467 = vsel %vm465, %v464, inf
        %v468 = vmin.f32 %v466, %v467
        %v469 = vrot.slane %v468, 4
        %v470 = vmin.f32 %v468, %v469
        %v471 = vrot.slane %v470, 2
        %v472 = vmin.f32 %v470, %v471
        %v473 = vrot.slane %v472, 1
        %v474 = vmin.f32 %v472, %v473
        %vm475 = vcmp.le.f32.partialorder %v463, %v474
        %vm476 = vcmp.le.f32.partialorder %v464, %v474
        %v477 = vsel %vm475, %v454, 16
        %v478 = vsel %vm476, %v455, 16
        %v479 = vsel %vm465, %v477, 2147483647
        %v480 = vsel %vm465, %v478, 2147483647
        %vm481 = vcmp.lt.s32.totalorder %v479, %v480
        %v482 = vsel %vm481, %v479, %v480
        %v483 = vrot.slane %v482, 4
        %vm484 = vcmp.lt.s32.totalorder %v482, %v483
        %v485 = vsel %vm484, %v482, %v483
        %v486 = vrot.slane %v485, 2
        %vm487 = vcmp.lt.s32.totalorder %v485, %v486
        %v488 = vsel %vm487, %v485, %v486
        %v489 = vrot.slane %v488, 1
        %vm490 = vcmp.lt.s32.totalorder %v488, %v489
        %v491 = vsel %vm490, %v488, %v489
        %vm492 = vcmp.eq.s32.totalorder %v454, %v491
        %vm493 = vcmp.eq.s32.totalorder %v455, %v491
        %v494 = vsel %vm492, 1, 0
        %v495 = vsel %vm493, 1, 0
        %v496 = vcvt.s32.f32 %v494
        %v497 = vcvt.s32.f32 %v495
        %v499 = vsel %vm465, %v408, 0
        %501 = vmatpush.msra.mxu0 0.0
        %502 = vmatpush.msra.mxu0 0.0
        %503 = vmatpush.msra.mxu0 0.0
        %504 = vmatpush.msra.mxu0 0.0
        %505 = vmatpush.msra.mxu0 0.0
        %506 = vmatpush.msra.mxu0 0.0
        %507 = vmatpush.msra.mxu0 0.0
        %508 = vmatpush.msra.mxu0 0.0
        %509 = vmatpush.msra.mxu0 0.0
        %510 = vmatpush.msra.mxu0 0.0
        %511 = vmatpush.msra.mxu0 0.0
        %512 = vmatpush.msra.mxu0 0.0
        %513 = vmatpush.msra.mxu0 0.0
        %514 = vmatpush.msra.mxu0 0.0
        %515 = vmatpush.msra.mxu0 %v497
        %516 = vmatpush.msra.mxu0 %v496
        %517 = vmatmul.f32.gmra.mxu0 %v499
        %v518 = vpop.f32.mrf.mxu0
        %v519 = vadd.f32 0.0, %v518
        %520 = vdwg.mxu0
        %v521 = vmax.f32 %v451, %v519
        %v522 = vsel %vm492, inf, %v463
        %v523 = vsel %vm493, inf, %v464
        %v524 = vsel %vm465, %v522, inf
        %v525 = vsel %vm465, %v523, inf
        %v526 = vmin.f32 %v524, %v525
        %v527 = vrot.slane %v526, 4
        %v528 = vmin.f32 %v526, %v527
        %v529 = vrot.slane %v528, 2
        %v530 = vmin.f32 %v528, %v529
        %v531 = vrot.slane %v530, 1
        %v532 = vmin.f32 %v530, %v531
        %vm533 = vcmp.le.f32.partialorder %v522, %v532
        %vm534 = vcmp.le.f32.partialorder %v523, %v532
        %v535 = vsel %vm533, %v454, 16
        %v536 = vsel %vm534, %v455, 16
        %v537 = vsel %vm465, %v535, 2147483647
        %v538 = vsel %vm465, %v536, 2147483647
        %vm539 = vcmp.lt.s32.totalorder %v537, %v538
        %v540 = vsel %vm539, %v537, %v538
        %v541 = vrot.slane %v540, 4
        %vm542 = vcmp.lt.s32.totalorder %v540, %v541
        %v543 = vsel %vm542, %v540, %v541
        %v544 = vrot.slane %v543, 2
        %vm545 = vcmp.lt.s32.totalorder %v543, %v544
        %v546 = vsel %vm545, %v543, %v544
        %v547 = vrot.slane %v546, 1
        %vm548 = vcmp.lt.s32.totalorder %v546, %v547
        %v549 = vsel %vm548, %v546, %v547
        %vm550 = vcmp.eq.s32.totalorder %v454, %v549
        %vm551 = vcmp.eq.s32.totalorder %v455, %v549
        %v552 = vsel %vm550, 1, 0
        %v553 = vsel %vm551, 1, 0
        %v554 = vcvt.s32.f32 %v552
        %v555 = vcvt.s32.f32 %v553
        %556 = vmatpush.msra.mxu0 0.0
        %557 = vmatpush.msra.mxu0 0.0
        %558 = vmatpush.msra.mxu0 0.0
        %559 = vmatpush.msra.mxu0 0.0
        %560 = vmatpush.msra.mxu0 0.0
        %561 = vmatpush.msra.mxu0 0.0
        %562 = vmatpush.msra.mxu0 0.0
        %563 = vmatpush.msra.mxu0 0.0
        %564 = vmatpush.msra.mxu0 0.0
        %565 = vmatpush.msra.mxu0 0.0
        %566 = vmatpush.msra.mxu0 0.0
        %567 = vmatpush.msra.mxu0 0.0
        %568 = vmatpush.msra.mxu0 0.0
        %569 = vmatpush.msra.mxu0 0.0
        %570 = vmatpush.msra.mxu0 %v555
        %571 = vmatpush.msra.mxu0 %v554
        %572 = vmatmul.f32.gmra.mxu0 %v499
        %v573 = vpop.f32.mrf.mxu0
        %v574 = vadd.f32 0.0, %v573
        %575 = vdwg.mxu0
        %v576 = vmax.f32 %v521, %v574
        %v577 = vsel %vm550, inf, %v522
        %v578 = vsel %vm551, inf, %v523
        %v579 = vsel %vm465, %v577, inf
        %v580 = vsel %vm465, %v578, inf
        %v581 = vmin.f32 %v579, %v580
        %v582 = vrot.slane %v581, 4
        %v583 = vmin.f32 %v581, %v582
        %v584 = vrot.slane %v583, 2
        %v585 = vmin.f32 %v583, %v584
        %v586 = vrot.slane %v585, 1
        %v587 = vmin.f32 %v585, %v586
        %vm588 = vcmp.le.f32.partialorder %v577, %v587
        %vm589 = vcmp.le.f32.partialorder %v578, %v587
        %v590 = vsel %vm588, %v454, 16
        %v591 = vsel %vm589, %v455, 16
        %v592 = vsel %vm465, %v590, 2147483647
        %v593 = vsel %vm465, %v591, 2147483647
        %vm594 = vcmp.lt.s32.totalorder %v592, %v593
        %v595 = vsel %vm594, %v592, %v593
        %v596 = vrot.slane %v595, 4
        %vm597 = vcmp.lt.s32.totalorder %v595, %v596
        %v598 = vsel %vm597, %v595, %v596
        %v599 = vrot.slane %v598, 2
        %vm600 = vcmp.lt.s32.totalorder %v598, %v599
        %v601 = vsel %vm600, %v598, %v599
        %v602 = vrot.slane %v601, 1
        %vm603 = vcmp.lt.s32.totalorder %v601, %v602
        %v604 = vsel %vm603, %v601, %v602
        %vm605 = vcmp.eq.s32.totalorder %v454, %v604
        %vm606 = vcmp.eq.s32.totalorder %v455, %v604
        %v607 = vsel %vm605, 1, 0
        %v608 = vsel %vm606, 1, 0
        %v609 = vcvt.s32.f32 %v607
        %v610 = vcvt.s32.f32 %v608
        %611 = vmatpush.msra.mxu0 0.0
        %612 = vmatpush.msra.mxu0 0.0
        %613 = vmatpush.msra.mxu0 0.0
        %614 = vmatpush.msra.mxu0 0.0
        %615 = vmatpush.msra.mxu0 0.0
        %616 = vmatpush.msra.mxu0 0.0
        %617 = vmatpush.msra.mxu0 0.0
        %618 = vmatpush.msra.mxu0 0.0
        %619 = vmatpush.msra.mxu0 0.0
        %620 = vmatpush.msra.mxu0 0.0
        %621 = vmatpush.msra.mxu0 0.0
        %622 = vmatpush.msra.mxu0 0.0
        %623 = vmatpush.msra.mxu0 0.0
        %624 = vmatpush.msra.mxu0 0.0
        %625 = vmatpush.msra.mxu0 %v610
        %626 = vmatpush.msra.mxu0 %v609
        %627 = vmatmul.f32.gmra.mxu0 %v499
        %v628 = vpop.f32.mrf.mxu0
        %v629 = vadd.f32 0.0, %v628
        %630 = vdwg.mxu0
        %v631 = vmax.f32 %v576, %v629
        %v632 = vadd.f32 %v631, %v431
        %633 = vst.msk [vmem:[%s223] sm:$0xff] %vm465, %v632
        %s634 = sand.u32 %s136, 1
        %s635 = scalar_lea.sflag [#allocation3], %s634
        %s636 = sand.u32 %s136, 1
        %s637 = smul.addr %s636, 8
        %s638 = scalar_lea.vmem [#allocation2], %s637
        // Predicated region
        $region37: #{tpu_custom_call.1} parent=35 // pred_check
          %p639 = pneg %p146
        $region38: #{tpu_custom_call.1} parent=35 // pred_check_branch
          %641 = sbr.rel (%p639) target = $region40
        $region39: #{tpu_custom_call.1} parent=35 // pred_region
          %643 = vsyncadd %s635, 0
          %s644 = sadd.s32 %s23, %s22
          %s645 = smul.addr %s644, 8
          %s646 = scalar_lea.hbm %s4, %s645
          %s648 = sshll.u32 %s638, 4
          %s649 = int_to_ptr.vmem [resolvable:$true] %s648
          %s650 = sshll.u32 %s646, 4
          %s651 = int_to_ptr.hbm [resolvable:$true] %s650
          %653 = dma.vmem_to_hbm [thread:$0]  %s649, 128, %s651, %s635
        $region40: #{tpu_custom_call.1} parent=35 // pred_fallthru
          _
      $region36: #{tpu_custom_call.1} parent=5 // pred_fallthru
        _
      %p654 = scmp.le.s32.totalorder 2, %s13
      // Predicated region
      $region41: #{tpu_custom_call.1} parent=5 // pred_check
        %p655 = pneg %p654
      $region42: #{tpu_custom_call.1} parent=5 // pred_check_branch
        %657 = sbr.rel (%p655) target = $region44
      $region43: #{tpu_custom_call.1} parent=5 // pred_region
        %s658 = ssub.s32 %s13, 2
        // Predicated region
        $region45: #{tpu_custom_call.1} parent=43 // pred_check
          %p659 = pneg %p152
        $region46: #{tpu_custom_call.1} parent=43 // pred_check_branch
          %661 = sbr.rel (%p659) target = $region48
        $region47: #{tpu_custom_call.1} parent=43 // pred_region
          %s662 = sand.u32 %s137, 1
          %s663 = scalar_lea.sflag [#allocation3], %s662
          %s664 = sand.u32 %s137, 1
          %s665 = smul.addr %s664, 8
          %s666 = scalar_lea.vmem [#allocation2], %s665
          %668 = dma.done %s663, 128
        $region48: #{tpu_custom_call.1} parent=43 // pred_fallthru
          _
      $region44: #{tpu_custom_call.1} parent=5 // pred_fallthru
        _
    $region6: #{tpu_custom_call.1} parent=1 // loop_footer
      %s17 = sadd.s32 1, %s13
    $region7: #{tpu_custom_call.1} parent=1 // loop_footer_branch
      %12 = sbr.rel target = $region3
    $region8: #{tpu_custom_call.1} parent=1 // loop_exit
      _
    %669 = vsyncpa [#allocation3], 1
    %s670 = scalar_lea.sflag [#allocation3], 1
    %671 = vsyncpa %s670, 1

</llo_original>
